<compile_context>
chip_gen: v7x
topology: tpu7x:2x2x1
jax: 0.10.0
libtpu: 0.0.40
codegen_flags: <defaults>
</compile_context>

<pallas_src>
import functools

import jax
import jax.numpy as jnp
from jax.experimental import pallas as pl
from jax.experimental.pallas import tpu as pltpu

LANE = 128  # slab width (one full lane tile)


def _align8(r):
    return (r + 7) & ~7


def pack_params(params):
    """Pack all (W, b) pairs into one zero-padded (R, 128) f32 slab.

    Returns (slab, meta); meta is a tuple of (fin, fout, w_off, b_off) per
    layer. Weights with fout == 1 are stored transposed as a single (1, fin)
    row so the kernel can do VPU mul + lane reduce without any transpose.
    Weight blocks start on 8-row boundaries (aligned sublane-tile loads).
    """
    blocks = []
    meta = []
    nxt = 0
    for w, b in params:
        fin, fout = int(w.shape[0]), int(w.shape[1])
        w_store = w.T if fout == 1 else w            # (1,fin) or (fin,fout)
        w_off = _align8(nxt)
        b_off = w_off + int(w_store.shape[0])
        blocks.append((w_off, jnp.asarray(w_store, jnp.float32)))
        blocks.append((b_off, jnp.reshape(jnp.asarray(b, jnp.float32), (1, fout))))
        meta.append((fin, fout, w_off, b_off))
        nxt = b_off + 1
    total_rows = _align8(nxt)
    slab = jnp.zeros((total_rows, LANE), jnp.float32)
    for off, arr in blocks:
        r, c = arr.shape
        slab = slab.at[off:off + r, :c].set(arr)
    return slab, tuple(meta)


def _fused_mlp_kernel(x_ref, p_ref, o_ref, *, meta):
    """Whole MLP in one kernel: h <- sigmoid(h @ W_l + b_l) for every layer.

    x_ref : (B, 2) VMEM
    p_ref : (R, 128) packed parameter slab, VMEM
    o_ref : (B, 1) VMEM
    """
    h = x_ref[...]                                       # (B, 2) f32
    for fin, fout, w_off, b_off in meta:
        b = p_ref[b_off:b_off + 1, 0:fout]               # (1, fout)
        if fout == 1:
            # Output layer: weight stored transposed as (1, fin).
            # VPU multiply + XLU lane reduce — keeps the MXU chain to one use.
            wt = p_ref[w_off:w_off + 1, 0:fin]           # (1, fin)
            y = b + jnp.sum(h * wt, axis=-1, keepdims=True)
        elif fin <= 2:
            # Degenerate contraction dim (K<=2): VPU broadcast-FMAs instead of
            # an almost-empty MXU push.
            w = p_ref[w_off:w_off + fin, 0:fout]          # (fin, fout)
            y = b
            for k in range(fin):
                y = y + h[:, k:k + 1] * w[k:k + 1, :]
        else:
            # Hidden->hidden layer: single MXU matmul.
            w = p_ref[w_off:w_off + fin, 0:fout]          # (fin, fout)
            y = jnp.dot(h, w, preferred_element_type=jnp.float32) + b
        h = jax.nn.sigmoid(y)                             # VPU/EUP elementwise
    o_ref[...] = h.astype(o_ref.dtype)                    # (B, 1) direct store


def make_xor_forward(meta):
    """Build a jitted forward specialized on the (static) packing metadata."""
    kernel = functools.partial(_fused_mlp_kernel, meta=meta)
    vmem = pl.BlockSpec(memory_space=pltpu.MemorySpace.VMEM)

    @jax.jit
    def forward(x, slab):
        B = x.shape[0]
        return pl.pallas_call(
            kernel,
            out_shape=jax.ShapeDtypeStruct((B, 1), jnp.float32),
            in_specs=[vmem, vmem],
            out_specs=vmem,
        )(x, slab)

    return forward


def init_params(key, hidden_layers):
    """Deterministic init mirroring the PyTorch module's __init__.

    - All weights: init.uniform_ -> U[0, 1).
    - Hidden-layer biases: PyTorch Linear default U[-1/sqrt(fan_in), 1/sqrt(fan_in)].
    - Output-layer bias: init.uniform_ -> U[0, 1).
    """
    dims = [2] + list(hidden_layers) + [1]
    params = []
    n_layers = len(dims) - 1
    for i in range(n_layers):
        fin, fout = dims[i], dims[i + 1]
        key, kw, kb = jax.random.split(key, 3)
        w = jax.random.uniform(kw, (fin, fout), jnp.float32, 0.0, 1.0)
        if i == n_layers - 1:
            b = jax.random.uniform(kb, (1, fout), jnp.float32, 0.0, 1.0)
        else:
            bound = 1.0 / float(fin) ** 0.5
            b = jax.random.uniform(kb, (1, fout), jnp.float32, -bound, bound)
        params.append((w, b))
    return params


def xor_forward_ref(x, params):
    """Pure-JAX reference for correctness checking."""
    h = x
    for w, b in params:
        h = jax.nn.sigmoid(h @ w + b)
    return h


# TODO(synk): fit()/predict() (Adam optimizer, MSELoss training loop, thresholding)
# are training/inference utilities, not part of the forward pass — not implemented.

if __name__ == "__main__":
    key = jax.random.PRNGKey(0)
    kx, kp = jax.random.split(key)

    hidden_layers = [32, 16]
    batch = 8

    # XOR-style inputs: 2 binary features per example.
    x = (jax.random.uniform(kx, (batch, 2), jnp.float32) > 0.5).astype(jnp.float32)
    params = init_params(kp, hidden_layers)

    slab, meta = pack_params(params)          # one-time packing at init
    forward = make_xor_forward(meta)

    out = jax.block_until_ready(forward(x, slab))
    ref = xor_forward_ref(x, params)

    assert out.shape == (batch, 1), out.shape
    assert jnp.allclose(out, ref, atol=1e-5, rtol=1e-5), (out, ref)

    print("KERNEL_OK")
</pallas_src>

<mosaic_0001>
module attributes {stable_mosaic.version = 11 : i64} {
  func.func @_fused_mlp_kernel(%arg0: memref<8x2xf32, #tpu.memory_space<vmem>>, %arg1: memref<56x128xf32, #tpu.memory_space<vmem>>, %arg2: memref<8x1xf32, #tpu.memory_space<vmem>>) attributes {dimension_semantics = [], scalar_prefetch = 0 : i64, scratch_operands = 0 : i64, tpu.core_type = #tpu.core_type<tc>} {
    %c0 = arith.constant 0 : index
    %c0_0 = arith.constant 0 : index
    %0 = vector.load %arg0[%c0, %c0_0] : memref<8x2xf32, #tpu.memory_space<vmem>>, vector<8x2xf32>
    %c2 = arith.constant 2 : index
    %c0_1 = arith.constant 0 : index
    %1 = vector.load %arg1[%c2, %c0_1] : memref<56x128xf32, #tpu.memory_space<vmem>>, vector<1x32xf32>
    %c0_2 = arith.constant 0 : index
    %c0_3 = arith.constant 0 : index
    %2 = vector.load %arg1[%c0_2, %c0_3] : memref<56x128xf32, #tpu.memory_space<vmem>>, vector<2x32xf32>
    %3 = vector.extract_strided_slice %0 {offsets = [0, 0], sizes = [8, 1], strides = [1, 1]} : vector<8x2xf32> to vector<8x1xf32>
    %4 = vector.extract_strided_slice %2 {offsets = [0, 0], sizes = [1, 32], strides = [1, 1]} : vector<2x32xf32> to vector<1x32xf32>
    %5 = vector.broadcast %3 : vector<8x1xf32> to vector<8x32xf32>
    %6 = vector.broadcast %4 : vector<1x32xf32> to vector<8x32xf32>
    %7 = arith.mulf %5, %6 : vector<8x32xf32>
    %8 = vector.broadcast %1 : vector<1x32xf32> to vector<8x32xf32>
    %9 = arith.addf %8, %7 : vector<8x32xf32>
    %10 = vector.extract_strided_slice %0 {offsets = [0, 1], sizes = [8, 1], strides = [1, 1]} : vector<8x2xf32> to vector<8x1xf32>
    %11 = vector.extract_strided_slice %2 {offsets = [1, 0], sizes = [1, 32], strides = [1, 1]} : vector<2x32xf32> to vector<1x32xf32>
    %12 = vector.broadcast %10 : vector<8x1xf32> to vector<8x32xf32>
    %13 = vector.broadcast %11 : vector<1x32xf32> to vector<8x32xf32>
    %14 = arith.mulf %12, %13 : vector<8x32xf32>
    %15 = arith.addf %9, %14 : vector<8x32xf32>
    %16 = arith.negf %15 : vector<8x32xf32>
    %17 = math.exp %16 : vector<8x32xf32>
    %cst = arith.constant 1.000000e+00 : f32
    %18 = vector.broadcast %cst : f32 to vector<8x32xf32>
    %19 = arith.addf %18, %17 : vector<8x32xf32>
    %20 = arith.divf %18, %19 : vector<8x32xf32>
    %c40 = arith.constant 40 : index
    %c0_4 = arith.constant 0 : index
    %21 = vector.load %arg1[%c40, %c0_4] : memref<56x128xf32, #tpu.memory_space<vmem>>, vector<1x16xf32>
    %c8 = arith.constant 8 : index
    %c0_5 = arith.constant 0 : index
    %22 = vector.load %arg1[%c8, %c0_5] : memref<56x128xf32, #tpu.memory_space<vmem>>, vector<32x16xf32>
    %cst_6 = arith.constant dense<0.000000e+00> : vector<8x16xf32>
    %23 = tpu.matmul %20, %22, %cst_6 {dimension_numbers = #tpu.dot_dimension_numbers<[1], [0], [0], [1], [0, 0, 1, 1], [], []>} : vector<8x32xf32>, vector<32x16xf32>, vector<8x16xf32> -> vector<8x16xf32>
    %24 = vector.broadcast %21 : vector<1x16xf32> to vector<8x16xf32>
    %25 = arith.addf %23, %24 : vector<8x16xf32>
    %26 = arith.negf %25 : vector<8x16xf32>
    %27 = math.exp %26 : vector<8x16xf32>
    %cst_7 = arith.constant 1.000000e+00 : f32
    %28 = vector.broadcast %cst_7 : f32 to vector<8x16xf32>
    %29 = arith.addf %28, %27 : vector<8x16xf32>
    %30 = arith.divf %28, %29 : vector<8x16xf32>
    %c49 = arith.constant 49 : index
    %c0_8 = arith.constant 0 : index
    %31 = vector.load %arg1[%c49, %c0_8] : memref<56x128xf32, #tpu.memory_space<vmem>>, vector<1x1xf32>
    %c48 = arith.constant 48 : index
    %c0_9 = arith.constant 0 : index
    %32 = vector.load %arg1[%c48, %c0_9] : memref<56x128xf32, #tpu.memory_space<vmem>>, vector<1x16xf32>
    %33 = vector.broadcast %32 : vector<1x16xf32> to vector<8x16xf32>
    %34 = arith.mulf %30, %33 : vector<8x16xf32>
    %cst_10 = arith.constant dense<0.000000e+00> : vector<8xf32>
    %35 = vector.multi_reduction <add>, %34, %cst_10 [1] : vector<8x16xf32> to vector<8xf32>
    %36 = vector.shape_cast %35 : vector<8xf32> to vector<8x1xf32>
    %37 = vector.broadcast %31 : vector<1x1xf32> to vector<8x1xf32>
    %38 = arith.addf %37, %36 : vector<8x1xf32>
    %39 = arith.negf %38 : vector<8x1xf32>
    %40 = math.exp %39 : vector<8x1xf32>
    %cst_11 = arith.constant 1.000000e+00 : f32
    %41 = vector.broadcast %cst_11 : f32 to vector<8x1xf32>
    %42 = arith.addf %41, %40 : vector<8x1xf32>
    %43 = arith.divf %41, %42 : vector<8x1xf32>
    %c0_12 = arith.constant 0 : index
    %c0_13 = arith.constant 0 : index
    %44 = vector.load %arg2[%c0_12, %c0_13] : memref<8x1xf32, #tpu.memory_space<vmem>>, vector<8x1xf32>
    tpu.vector_store %arg2[%c0_12, %c0_13], %43 {strides = array<i32>} : memref<8x1xf32, #tpu.memory_space<vmem>>, vector<8x1xf32>,
    return
  }
}

</mosaic_0001>

<llo_original>
// kernel: forward.1
$region0: #{forward.1}
  #allocation0 [shape = 'u32[]', space=smem, size = 0x4, offset = 0x4, fixed_abs, tag = 'smem constant byte address 0x4 - core index']
  #allocation1 [shape = 'u32[144,128]{1,0:T(1,128)}', space=vmem, size = 0x12000, scoped, tag = 'internal scratch']
  %s0 = inlined_call_operand.vmem [shape: f32[8,2], index: 0, kind: input, shape index: {}]
  %s1 = inlined_call_operand.hbm [shape: f32[56,128], index: 1, kind: input, shape index: {}]
  %s2 = inlined_call_operand.vmem [shape: f32[8,1], index: 2, kind: output, shape index: {}]
  %s3 = sld [smem:[#allocation0]]
  $region22: #{forward.1} parent=0
    _
  %s5 = ssub.s32 1, %s3
  %s6 = scalar_select 0, %s5, %s3
  $region1: #{forward.1} parent=0
    #allocation2 [shape = 'u8[28672]{0}', space=vmem, size = 0x7000, scoped, tag = 'input window, operand 1, single buffered']
    #allocation3 [shape = 's32[1]{0}', space=sflag, size = 0x4, scoped, tag = 'scoped memory for forward.1']
    %7 = vsyncpa [#allocation3], 0
    // Predicated region
    $region2: #{forward.1} parent=1 // pred_check
      _
    $region3: #{forward.1} parent=1 // pred_check_branch
      %9 = sbr.rel (0) target = $region5
    $region4: #{forward.1} parent=1 // pred_region
      _
    $region5: #{forward.1} parent=1 // pred_fallthru
      _
    // Predicated region
    $region6: #{forward.1} parent=1 // pred_check
      _
    $region7: #{forward.1} parent=1 // pred_check_branch
      %11 = sbr.rel (0) target = $region9
    $region8: #{forward.1} parent=1 // pred_region
      %s13 = ssub.s32 896, 896
      %14 = vsyncadd [#allocation3], %s13
      %s15 = sshll.u32 [#allocation2], 4
      %s16 = int_to_ptr.vmem [resolvable:$true] %s15
      %21 = dma.hbm_to_vmem [thread:$0]  %s1, 896, %s16, [#allocation3], 128, 128, 8
    $region9: #{forward.1} parent=1 // pred_fallthru
      _
    // Predicated region
    $region10: #{forward.1} parent=1 // pred_check
      _
    $region11: #{forward.1} parent=1 // pred_check_branch
      %23 = sbr.rel (0) target = $region13
    $region12: #{forward.1} parent=1 // pred_region
      %24 = dma.done [#allocation3], 896
    $region13: #{forward.1} parent=1 // pred_fallthru
      _
    %v25 = vld [vmem:[%s0] sm:$0xff]
    %v26 = vld [vmem:[#allocation2 + $0x2] sm:$0x1]
    %v27 = vld [vmem:[#allocation2] sm:$0x3]
    %29 = vset.pattern.permute.xlu0 0
    %30 = vperm.xlu0 %29, %v25
    %v31 = vpop.permute.xlu0 %30
    %v33 = vlaneseq
    %v34 = vshrl.u32 %v33, 7
    %v35 = vsub.s32 0, %v34
    %v36 = vrot.slane %v27, %v35
    %v37 = vmul.f32 %v31, %v36
    %v38 = vlaneseq
    %v39 = vshrl.u32 %v38, 7
    %v40 = vsub.s32 0, %v39
    %v41 = vrot.slane %v26, %v40
    %v42 = vadd.f32 %v41, %v37
    %43 = vset.pattern.permute.xlu0 1
    %44 = vperm.xlu0 %43, %v25
    %v45 = vpop.permute.xlu0 %44
    %v47 = vlaneseq
    %v48 = vshrl.u32 %v47, 7
    %v49 = vsub.s32 1, %v48
    %v50 = vrot.slane %v27, %v49
    %v51 = vmul.f32 %v45, %v50
    %v52 = vadd.f32 %v42, %v51
    %v53 = vxor.u32 %v52, 2147483648
    %v54 = vmul.f32 %v53, 1.442695
    %v55 = vpow.pop %v54
    %v56 = vadd.f32 %v55, 1.0
    %v57 = vrcp.pop %v56
    %v58 = vmul.f32 1.0, %v57
    %v59 = vld [vmem:[#allocation2 + $0x28] sm:$0x1]
    %v60 = vld [vmem:[#allocation2 + $0x8] sm:$0xff]
    %v61 = vld [vmem:[#allocation2 + $0x10] sm:$0xff]
    %v62 = vld [vmem:[#allocation2 + $0x18] sm:$0xff]
    %v63 = vld [vmem:[#allocation2 + $0x20] sm:$0xff]
    %v64 = vlaneseq
    %v65 = vshrl.u32 %v64, 7
    %v66 = vsub.s32 0, %v65
    %v67 = vrot.slane %v59, %v66
    %vm68 = vcmask 261120
    %v70 = vsel %vm68, %v58, 0
    %72 = vmatprep.subr.mxu0 0.0
    %73 = vmatpush1.msra.mxu0 %v60
    %74 = vmatprep.subr.mxu0 0.0
    %75 = vmatpush1.msra.mxu0 %v61
    %76 = vmatprep.subr.mxu0 0.0
    %77 = vmatpush1.msra.mxu0 %v62
    %78 = vmatprep.subr.mxu0 0.0
    %79 = vmatpush1.msra.mxu0 %v63
    %80 = vmatprep.subr.mxu0 0.0
    %81 = vmatpush1.msra.mxu0 0.0
    %82 = vmatprep.subr.mxu0 0.0
    %83 = vmatpush1.msra.mxu0 0.0
    %84 = vmatprep.subr.mxu0 0.0
    %85 = vmatpush1.msra.mxu0 0.0
    %86 = vmatprep.subr.mxu0 0.0
    %87 = vmatpush1.msra.mxu0 0.0
    %88 = vmatprep.subr.mxu0 0.0
    %89 = vmatpush1.msra.mxu0 0.0
    %90 = vmatprep.subr.mxu0 0.0
    %91 = vmatpush1.msra.mxu0 0.0
    %92 = vmatprep.subr.mxu0 0.0
    %93 = vmatpush1.msra.mxu0 0.0
    %94 = vmatprep.subr.mxu0 0.0
    %95 = vmatpush1.msra.mxu0 0.0
    %96 = vmatprep.subr.mxu0 0.0
    %97 = vmatpush1.msra.mxu0 0.0
    %98 = vmatprep.subr.mxu0 0.0
    %99 = vmatpush1.msra.mxu0 0.0
    %100 = vmatprep.subr.mxu0 0.0
    %101 = vmatpush1.msra.mxu0 0.0
    %102 = vmatprep.subr.mxu0 0.0
    %103 = vmatpush1.msra.mxu0 0.0
    %104 = vmatprep.subr.mxu0 0.0
    %105 = vmatpush1.msra.mxu0 0.0
    %106 = vmatprep.subr.mxu0 0.0
    %107 = vmatpush1.msra.mxu0 0.0
    %108 = vmatprep.subr.mxu0 0.0
    %109 = vmatpush1.msra.mxu0 0.0
    %110 = vmatprep.subr.mxu0 0.0
    %111 = vmatpush1.msra.mxu0 0.0
    %112 = vmatprep.subr.mxu0 0.0
    %113 = vmatpush1.msra.mxu0 0.0
    %114 = vmatprep.subr.mxu0 0.0
    %115 = vmatpush1.msra.mxu0 0.0
    %116 = vmatprep.subr.mxu0 0.0
    %117 = vmatpush1.msra.mxu0 0.0
    %118 = vmatprep.subr.mxu0 0.0
    %119 = vmatpush1.msra.mxu0 0.0
    %120 = vmatprep.subr.mxu0 0.0
    %121 = vmatpush1.msra.mxu0 0.0
    %122 = vmatprep.subr.mxu0 0.0
    %123 = vmatpush1.msra.mxu0 0.0
    %124 = vmatprep.subr.mxu0 0.0
    %125 = vmatpush1.msra.mxu0 0.0
    %126 = vmatprep.subr.mxu0 0.0
    %127 = vmatpush1.msra.mxu0 0.0
    %128 = vmatprep.subr.mxu0 0.0
    %129 = vmatpush1.msra.mxu0 0.0
    %130 = vmatprep.subr.mxu0 0.0
    %131 = vmatpush1.msra.mxu0 0.0
    %132 = vmatprep.subr.mxu0 0.0
    %133 = vmatpush1.msra.mxu0 0.0
    %134 = vmatprep.subr.mxu0 0.0
    %135 = vmatpush1.msra.mxu0 0.0
    %136 = vmatprep.mubr.f32.mxu0 0.0
    %137 = vmatmul.mubr.f32.gmra.mrb[0].mxu0 %v70
    %v138 = vpop.f32.mrb[0].mxu0
    %v139 = vadd.f32 %v67, %v138
    %v140 = vpop.f32.mrb[0].mxu0
    %141 = vdwg.mxu0
    %v142 = vxor.u32 %v139, 2147483648
    %v143 = vmul.f32 %v142, 1.442695
    %v144 = vpow.pop %v143
    %v145 = vadd.f32 %v144, 1.0
    %v146 = vrcp.pop %v145
    %v147 = vmul.f32 1.0, %v146
    %v148 = vld [vmem:[#allocation2 + $0x31] sm:$0x1]
    %v149 = vld [vmem:[#allocation2 + $0x30] sm:$0x1]
    %v150 = vlaneseq
    %v151 = vshrl.u32 %v150, 7
    %v152 = vsub.s32 0, %v151
    %v153 = vrot.slane %v149, %v152
    %v154 = vmul.f32 %v147, %v153
    %vm155 = vcmask 130048
    %v156 = vsel %vm155, %v154, 0.0
    %157 = vadd.xlane.f32.xlu0 %v156
    %v158 = vpop.xlane.xlu0 %157
    %v159 = vlaneseq
    %v160 = vshrl.u32 %v159, 7
    %v161 = vsub.s32 0, %v160
    %v162 = vrot.slane %v148, %v161
    %v163 = vadd.f32 %v162, %v158
    %v164 = vxor.u32 %v163, 2147483648
    %v165 = vmul.f32 %v164, 1.442695
    %v166 = vpow.pop %v165
    %v167 = vadd.f32 %v166, 1.0
    %v168 = vrcp.pop %v167
    %v169 = vmul.f32 1.0, %v168
    %vm170 = vcmask 7168
    %171 = vst.msk [vmem:[%s2] sm:$0xff] %vm170, %v169
    // Predicated region
    $region14: #{forward.1} parent=1 // pred_check
      _
    $region15: #{forward.1} parent=1 // pred_check_branch
      %173 = sbr.rel (0) target = $region17
    $region16: #{forward.1} parent=1 // pred_region
      _
    $region17: #{forward.1} parent=1 // pred_fallthru
      _
    // Predicated region
    $region18: #{forward.1} parent=1 // pred_check
      _
    $region19: #{forward.1} parent=1 // pred_check_branch
      %175 = sbr.rel (0) target = $region21
    $region20: #{forward.1} parent=1 // pred_region
      _
    $region21: #{forward.1} parent=1 // pred_fallthru
      _
    %176 = vsyncpa [#allocation3], 1

</llo_original>
